<compile_context>
chip_gen: v5e
topology: v5e:2x2
jax: 0.10.0
libtpu: 0.0.40
codegen_flags: <defaults>
</compile_context>

<pallas_src>
import functools

import jax
import jax.numpy as jnp
from jax.experimental import pallas as pl
from jax.experimental.pallas import tpu as pltpu


S2 = 0.5             # deterministic hyper-parameter of TotalLoss_6.__init__
SNICO_WEIGHT = 0.01  # weight of the SniCo loss in the total loss
TEMPERATURE = 0.07   # NCE temperature


# ---------------------------------------------------------------------------
# Fused kernel: BCE + vectorized 3x NCE + weighted total, scalars via SMEM
# ---------------------------------------------------------------------------
def _total_loss_kernel(cls_ref, pair_ref, out_ref, *, temperature, s2,
                       snico_weight):
    f32 = jnp.float32

    # -------- ActionLoss: row-normalized label, then mean BCE ---------------
    scores = cls_ref[0].astype(f32)                             # (B, NC)
    lbl = cls_ref[1].astype(f32)                                # (B, NC)
    rowsum = jnp.sum(lbl, axis=1, keepdims=True)                # (B, 1)
    lbl = lbl * pl.reciprocal(rowsum, approx=False)             # no VALU divide
    # PyTorch BCELoss clamps the log terms at -100 (protects log(0) only;
    # scores are assumed to lie in [0, 1] as with torch.nn.BCELoss).
    log_x = jnp.maximum(jnp.log(scores), -100.0)
    log_1mx = jnp.maximum(jnp.log(1.0 - scores), -100.0)
    n_elem = scores.shape[0] * scores.shape[1]
    loss_cls = jnp.sum(-(lbl * log_x + (1.0 - lbl) * log_1mx)) * (1.0 / n_elem)

    # -------- SniCoLoss_3: three NCE terms, vectorized over leading 3B ------
    inv_t = 1.0 / temperature
    eps_sq = 1e-24   # F.normalize clamps the NORM at 1e-12 -> clamp sum-sq

    def _l2norm(x):
        ss = jnp.sum(x * x, axis=-1, keepdims=True)
        return x * jax.lax.rsqrt(jnp.maximum(ss, eps_sq))       # EUP rsqrt

    q_raw = pair_ref[0].astype(f32)                             # (3B, T, C)
    k_raw = pair_ref[1].astype(f32)                             # (3B, T, C)
    neg_raw = pair_ref[2].astype(f32)                           # (3B, T, C)

    nb = q_raw.shape[0]           # 3 * B (three NCE terms folded into batch)
    b = nb // 3                   # per-term batch size (static)

    qn = _l2norm(jnp.mean(q_raw, axis=1))                       # (3B, C)
    kn = _l2norm(jnp.mean(k_raw, axis=1))                       # (3B, C)
    negn = _l2norm(neg_raw)                                     # (3B, T, C)

    # Fold l_pos in as the first "negative": one broadcast multiply + one
    # lane-axis reduce produces all logits (no degenerate M=1 matmul on MXU).
    cat = jnp.concatenate([kn[:, None, :], negn], axis=1)       # (3B, 1+T, C)
    logits = jnp.sum(qn[:, None, :] * cat, axis=-1) * inv_t     # (3B, 1+T)

    # CrossEntropyLoss with target class 0: logsumexp(logits) - logits[:, 0]
    m = jnp.max(logits, axis=-1, keepdims=True)                 # (3B, 1)
    lse = jnp.log(jnp.sum(jnp.exp(logits - m), axis=-1, keepdims=True)) + m
    ce = lse - logits[:, 0:1]                                   # (3B, 1)

    # Per-term weights (1, 1, s2): rows [0, 2B) get 1.0, rows [2B, 3B) get s2.
    ridx = jax.lax.broadcasted_iota(jnp.int32, ce.shape, 0)     # (3B, 1)
    w = jnp.where(ridx >= 2 * b, f32(s2), f32(1.0))
    loss_snico = jnp.sum(ce * w) * (1.0 / b)

    loss_total = loss_cls + snico_weight * loss_snico

    # Scalar outputs through SMEM: a single scalar store each.
    out_ref[0] = loss_cls
    out_ref[1] = loss_snico
    out_ref[2] = loss_total


# ---------------------------------------------------------------------------
# Wrapper: pack 9 operands into 2 DMAs, one pallas_call for the whole loss
# ---------------------------------------------------------------------------
def _full_spec(shape):
    nd = len(shape)
    return pl.BlockSpec(shape, lambda *_: (0,) * nd)


@jax.jit
def total_loss_6(video_scores, label, contrast_pairs, contrast_pairs_2):
    # TODO(synk): if production shapes grow, tile over the folded 3B axis with
    # a "parallel" grid dim (megacore on v7x) and size the tile against v7x's
    # 64 MiB physical / 32 MiB default scoped VMEM (set vmem_limit_bytes via
    # pltpu.CompilerParams); at the current kilobyte sizes a single gridless
    # launch with two packed operands minimizes the dominant dispatch/DMA cost.
    cls_packed = jnp.stack([video_scores, label], axis=0)       # (2, B, NC)

    q_all = jnp.concatenate(
        [contrast_pairs["HA"], contrast_pairs["HB"], contrast_pairs_2["HA"]],
        axis=0)                                                 # (3B, T, C)
    k_all = jnp.concatenate(
        [contrast_pairs["EA"], contrast_pairs["EB"], contrast_pairs_2["EA"]],
        axis=0)                                                 # (3B, T, C)
    neg_all = jnp.concatenate(
        [contrast_pairs["EB"], contrast_pairs["EA"], contrast_pairs_2["EB"]],
        axis=0)                                                 # (3B, T, C)
    pair_packed = jnp.stack([q_all, k_all, neg_all], axis=0)    # (3, 3B, T, C)

    out = pl.pallas_call(
        functools.partial(_total_loss_kernel, temperature=TEMPERATURE,
                          s2=S2, snico_weight=SNICO_WEIGHT),
        out_shape=jax.ShapeDtypeStruct((3,), jnp.float32),
        in_specs=[_full_spec(cls_packed.shape), _full_spec(pair_packed.shape)],
        out_specs=pl.BlockSpec(memory_space=pltpu.MemorySpace.SMEM),
    )(cls_packed, pair_packed)

    loss_cls, loss_snico, loss_total = out[0], out[1], out[2]
    loss_dict = {"Loss/Action": loss_cls,
                 "Loss/SniCo": loss_snico,
                 "Loss/Total": loss_total}
    return loss_total, loss_dict


# ---------------------------------------------------------------------------
# Pure-JAX reference (PyTorch-faithful math) for a correctness check
# ---------------------------------------------------------------------------
def _ref_total(video_scores, label, cp, cp2):
    lbl = label / jnp.sum(label, axis=1, keepdims=True)
    loss_cls = jnp.mean(
        -(lbl * jnp.maximum(jnp.log(video_scores), -100.0)
          + (1.0 - lbl) * jnp.maximum(jnp.log(1.0 - video_scores), -100.0)))

    def nce(qs, ks, neg, T=TEMPERATURE):
        q = jnp.mean(qs, axis=1)
        k = jnp.mean(ks, axis=1)
        norm = lambda x, a: x / jnp.maximum(
            jnp.sqrt(jnp.sum(x * x, axis=a, keepdims=True)), 1e-12)
        q, k, neg = norm(q, 1), norm(k, 1), norm(neg, 2)
        l_pos = jnp.sum(q * k, axis=1, keepdims=True)
        l_neg = jnp.einsum("bc,btc->bt", q, neg)
        logits = jnp.concatenate([l_pos, l_neg], axis=1) / T
        return jnp.mean(jax.nn.logsumexp(logits, axis=1) - logits[:, 0])

    loss_snico = (nce(cp["HA"], cp["EA"], cp["EB"])
                  + nce(cp["HB"], cp["EB"], cp["EA"])
                  + S2 * nce(cp2["HA"], cp2["EA"], cp2["EB"]))
    return loss_cls + SNICO_WEIGHT * loss_snico


# ---------------------------------------------------------------------------
if __name__ == "__main__":
    B, NUM_CLASSES, T, C = 2, 4, 8, 32
    keys = jax.random.split(jax.random.PRNGKey(0), 9)

    video_scores = jax.nn.sigmoid(
        jax.random.normal(keys[0], (B, NUM_CLASSES), jnp.float32))
    label = (jax.random.uniform(keys[1], (B, NUM_CLASSES)) > 0.5).astype(jnp.float32)
    label = label.at[:, 0].set(1.0)  # guarantee positive row sums (BCE precondition)

    contrast_pairs = {
        name: jax.random.normal(k, (B, T, C), jnp.float32)
        for name, k in zip(["HA", "EA", "HB", "EB"], keys[2:6])
    }
    contrast_pairs_2 = {
        name: jax.random.normal(k, (B, T, C), jnp.float32)
        for name, k in zip(["HA", "EA", "EB"], keys[6:9])
    }

    loss_total, loss_dict = total_loss_6(video_scores, label,
                                         contrast_pairs, contrast_pairs_2)
    loss_total = jax.block_until_ready(loss_total)
    jax.block_until_ready(loss_dict)

    ref = _ref_total(video_scores, label, contrast_pairs, contrast_pairs_2)
    assert jnp.allclose(loss_total, ref, atol=1e-4, rtol=1e-4), (loss_total, ref)
    assert jnp.allclose(loss_dict["Loss/Total"], loss_total)
    assert jnp.allclose(loss_dict["Loss/Action"] + SNICO_WEIGHT * loss_dict["Loss/SniCo"],
                        loss_total, atol=1e-6)

    print("KERNEL_OK")
</pallas_src>

<mosaic_0001>
module attributes {stable_mosaic.version = 11 : i64} {
  func.func @_total_loss_kernel(%arg0: memref<2x2x4xf32, #tpu.memory_space<vmem>>, %arg1: memref<3x6x8x32xf32, #tpu.memory_space<vmem>>, %arg2: memref<3xf32, #tpu.memory_space<smem>>) attributes {dimension_semantics = [], scalar_prefetch = 0 : i64, scratch_operands = 0 : i64, tpu.core_type = #tpu.core_type<tc>} {
    %c0 = arith.constant 0 : index
    %c0_0 = arith.constant 0 : index
    %c0_1 = arith.constant 0 : index
    %0 = vector.load %arg0[%c0, %c0_0, %c0_1] : memref<2x2x4xf32, #tpu.memory_space<vmem>>, vector<1x2x4xf32>
    %1 = vector.shape_cast %0 : vector<1x2x4xf32> to vector<2x4xf32>
    %c1 = arith.constant 1 : index
    %c0_2 = arith.constant 0 : index
    %c0_3 = arith.constant 0 : index
    %2 = vector.load %arg0[%c1, %c0_2, %c0_3] : memref<2x2x4xf32, #tpu.memory_space<vmem>>, vector<1x2x4xf32>
    %3 = vector.shape_cast %2 : vector<1x2x4xf32> to vector<2x4xf32>
    %cst = arith.constant dense<0.000000e+00> : vector<2xf32>
    %4 = vector.multi_reduction <add>, %3, %cst [1] : vector<2x4xf32> to vector<2xf32>
    %5 = vector.shape_cast %4 : vector<2xf32> to vector<2x1xf32>
    %6 = tpu.reciprocal %5 : vector<2x1xf32> -> vector<2x1xf32>
    %7 = vector.broadcast %6 : vector<2x1xf32> to vector<2x4xf32>
    %8 = arith.mulf %3, %7 : vector<2x4xf32>
    %9 = math.log %1 : vector<2x4xf32>
    %cst_4 = arith.constant -1.000000e+02 : f32
    %10 = vector.broadcast %cst_4 : f32 to vector<2x4xf32>
    %11 = arith.maximumf %9, %10 : vector<2x4xf32>
    %cst_5 = arith.constant 1.000000e+00 : f32
    %12 = vector.broadcast %cst_5 : f32 to vector<2x4xf32>
    %13 = arith.subf %12, %1 : vector<2x4xf32>
    %14 = math.log %13 : vector<2x4xf32>
    %cst_6 = arith.constant -1.000000e+02 : f32
    %15 = vector.broadcast %cst_6 : f32 to vector<2x4xf32>
    %16 = arith.maximumf %14, %15 : vector<2x4xf32>
    %17 = arith.mulf %8, %11 : vector<2x4xf32>
    %cst_7 = arith.constant 1.000000e+00 : f32
    %18 = vector.broadcast %cst_7 : f32 to vector<2x4xf32>
    %19 = arith.subf %18, %8 : vector<2x4xf32>
    %20 = arith.mulf %19, %16 : vector<2x4xf32>
    %21 = arith.addf %17, %20 : vector<2x4xf32>
    %cst_8 = arith.constant 0.000000e+00 : f32
    %22 = vector.broadcast %cst_8 : f32 to vector<2x4xf32>
    %23 = arith.subf %22, %21 : vector<2x4xf32>
    %24 = vector.shape_cast %23 : vector<2x4xf32> to vector<1x2x4xf32>
    %cst_9 = arith.constant dense<0.000000e+00> : vector<1xf32>
    %25 = vector.multi_reduction <add>, %24, %cst_9 [1, 2] : vector<1x2x4xf32> to vector<1xf32>
    %26 = vector.shape_cast %25 : vector<1xf32> to vector<1x1x1xf32>
    %27 = vector.extract %26[0, 0, 0] : f32 from vector<1x1x1xf32>
    %cst_10 = arith.constant 1.250000e-01 : f32
    %28 = arith.mulf %27, %cst_10 : f32
    %c0_11 = arith.constant 0 : index
    %c0_12 = arith.constant 0 : index
    %c0_13 = arith.constant 0 : index
    %c0_14 = arith.constant 0 : index
    %29 = vector.load %arg1[%c0_11, %c0_12, %c0_13, %c0_14] : memref<3x6x8x32xf32, #tpu.memory_space<vmem>>, vector<1x6x8x32xf32>
    %30 = vector.shape_cast %29 : vector<1x6x8x32xf32> to vector<6x8x32xf32>
    %c1_15 = arith.constant 1 : index
    %c0_16 = arith.constant 0 : index
    %c0_17 = arith.constant 0 : index
    %c0_18 = arith.constant 0 : index
    %31 = vector.load %arg1[%c1_15, %c0_16, %c0_17, %c0_18] : memref<3x6x8x32xf32, #tpu.memory_space<vmem>>, vector<1x6x8x32xf32>
    %32 = vector.shape_cast %31 : vector<1x6x8x32xf32> to vector<6x8x32xf32>
    %c2 = arith.constant 2 : index
    %c0_19 = arith.constant 0 : index
    %c0_20 = arith.constant 0 : index
    %c0_21 = arith.constant 0 : index
    %33 = vector.load %arg1[%c2, %c0_19, %c0_20, %c0_21] : memref<3x6x8x32xf32, #tpu.memory_space<vmem>>, vector<1x6x8x32xf32>
    %34 = vector.shape_cast %33 : vector<1x6x8x32xf32> to vector<6x8x32xf32>
    %cst_22 = arith.constant dense<0.000000e+00> : vector<6x32xf32>
    %35 = vector.multi_reduction <add>, %30, %cst_22 [1] : vector<6x8x32xf32> to vector<6x32xf32>
    %cst_23 = arith.constant 8.000000e+00 : f32
    %36 = vector.broadcast %cst_23 : f32 to vector<6x32xf32>
    %37 = arith.divf %35, %36 : vector<6x32xf32>
    %38 = arith.mulf %37, %37 : vector<6x32xf32>
    %cst_24 = arith.constant dense<0.000000e+00> : vector<6xf32>
    %39 = vector.multi_reduction <add>, %38, %cst_24 [1] : vector<6x32xf32> to vector<6xf32>
    %40 = vector.shape_cast %39 : vector<6xf32> to vector<6x1xf32>
    %cst_25 = arith.constant 1.000000e-24 : f32
    %41 = vector.broadcast %cst_25 : f32 to vector<6x1xf32>
    %42 = arith.maximumf %40, %41 : vector<6x1xf32>
    %43 = math.rsqrt %42 : vector<6x1xf32>
    %44 = vector.broadcast %43 : vector<6x1xf32> to vector<6x32xf32>
    %45 = arith.mulf %37, %44 : vector<6x32xf32>
    %cst_26 = arith.constant dense<0.000000e+00> : vector<6x32xf32>
    %46 = vector.multi_reduction <add>, %32, %cst_26 [1] : vector<6x8x32xf32> to vector<6x32xf32>
    %cst_27 = arith.constant 8.000000e+00 : f32
    %47 = vector.broadcast %cst_27 : f32 to vector<6x32xf32>
    %48 = arith.divf %46, %47 : vector<6x32xf32>
    %49 = arith.mulf %48, %48 : vector<6x32xf32>
    %cst_28 = arith.constant dense<0.000000e+00> : vector<6xf32>
    %50 = vector.multi_reduction <add>, %49, %cst_28 [1] : vector<6x32xf32> to vector<6xf32>
    %51 = vector.shape_cast %50 : vector<6xf32> to vector<6x1xf32>
    %cst_29 = arith.constant 1.000000e-24 : f32
    %52 = vector.broadcast %cst_29 : f32 to vector<6x1xf32>
    %53 = arith.maximumf %51, %52 : vector<6x1xf32>
    %54 = math.rsqrt %53 : vector<6x1xf32>
    %55 = vector.broadcast %54 : vector<6x1xf32> to vector<6x32xf32>
    %56 = arith.mulf %48, %55 : vector<6x32xf32>
    %57 = arith.mulf %34, %34 : vector<6x8x32xf32>
    %cst_30 = arith.constant dense<0.000000e+00> : vector<6x8xf32>
    %58 = vector.multi_reduction <add>, %57, %cst_30 [2] : vector<6x8x32xf32> to vector<6x8xf32>
    %59 = vector.shape_cast %58 : vector<6x8xf32> to vector<6x8x1xf32>
    %cst_31 = arith.constant 1.000000e-24 : f32
    %60 = vector.broadcast %cst_31 : f32 to vector<6x8x1xf32>
    %61 = arith.maximumf %59, %60 : vector<6x8x1xf32>
    %62 = math.rsqrt %61 : vector<6x8x1xf32>
    %63 = vector.broadcast %62 : vector<6x8x1xf32> to vector<6x8x32xf32>
    %64 = arith.mulf %34, %63 : vector<6x8x32xf32>
    %65 = vector.shape_cast %56 : vector<6x32xf32> to vector<6x1x32xf32>
    %66 = tpu.concatenate %65, %64 in 1 : vector<6x1x32xf32>, vector<6x8x32xf32> -> vector<6x9x32xf32>
    %67 = vector.shape_cast %45 : vector<6x32xf32> to vector<6x1x32xf32>
    %68 = vector.broadcast %67 : vector<6x1x32xf32> to vector<6x9x32xf32>
    %69 = arith.mulf %68, %66 : vector<6x9x32xf32>
    %cst_32 = arith.constant dense<0.000000e+00> : vector<6x9xf32>
    %70 = vector.multi_reduction <add>, %69, %cst_32 [2] : vector<6x9x32xf32> to vector<6x9xf32>
    %cst_33 = arith.constant 14.2857141 : f32
    %71 = vector.broadcast %cst_33 : f32 to vector<6x9xf32>
    %72 = arith.mulf %70, %71 : vector<6x9xf32>
    %cst_34 = arith.constant dense<0xFF800000> : vector<6xf32>
    %73 = vector.multi_reduction <maximumf>, %72, %cst_34 [1] : vector<6x9xf32> to vector<6xf32>
    %74 = vector.shape_cast %73 : vector<6xf32> to vector<6x1xf32>
    %75 = vector.broadcast %74 : vector<6x1xf32> to vector<6x9xf32>
    %76 = arith.subf %72, %75 : vector<6x9xf32>
    %77 = math.exp %76 : vector<6x9xf32>
    %cst_35 = arith.constant dense<0.000000e+00> : vector<6xf32>
    %78 = vector.multi_reduction <add>, %77, %cst_35 [1] : vector<6x9xf32> to vector<6xf32>
    %79 = vector.shape_cast %78 : vector<6xf32> to vector<6x1xf32>
    %80 = math.log %79 : vector<6x1xf32>
    %81 = arith.addf %80, %74 : vector<6x1xf32>
    %82 = vector.extract_strided_slice %72 {offsets = [0, 0], sizes = [6, 1], strides = [1, 1]} : vector<6x9xf32> to vector<6x1xf32>
    %83 = arith.subf %81, %82 : vector<6x1xf32>
    %84 = tpu.iota {dimensions = array<i32: 0>} : vector<6x1xi32>
    %c4_i32 = arith.constant 4 : i32
    %85 = vector.broadcast %c4_i32 : i32 to vector<6x1xi32>
    %86 = arith.cmpi sge, %84, %85 : vector<6x1xi32>
    %cst_36 = arith.constant 5.000000e-01 : f32
    %cst_37 = arith.constant 1.000000e+00 : f32
    %87 = vector.broadcast %cst_36 : f32 to vector<6x1xf32>
    %88 = vector.broadcast %cst_37 : f32 to vector<6x1xf32>
    %89 = arith.select %86, %87, %88 : vector<6x1xi1>, vector<6x1xf32>
    %90 = arith.mulf %83, %89 : vector<6x1xf32>
    %91 = vector.shape_cast %90 : vector<6x1xf32> to vector<1x6x1xf32>
    %cst_38 = arith.constant dense<0.000000e+00> : vector<1xf32>
    %92 = vector.multi_reduction <add>, %91, %cst_38 [1, 2] : vector<1x6x1xf32> to vector<1xf32>
    %93 = vector.shape_cast %92 : vector<1xf32> to vector<1x1x1xf32>
    %94 = vector.extract %93[0, 0, 0] : f32 from vector<1x1x1xf32>
    %cst_39 = arith.constant 5.000000e-01 : f32
    %95 = arith.mulf %94, %cst_39 : f32
    %cst_40 = arith.constant 0.00999999977 : f32
    %96 = arith.mulf %cst_40, %95 : f32
    %97 = arith.addf %28, %96 : f32
    %c0_41 = arith.constant 0 : index
    %98 = memref.load %arg2[%c0_41] : memref<3xf32, #tpu.memory_space<smem>>
    memref.store %28, %arg2[%c0_41] : memref<3xf32, #tpu.memory_space<smem>>
    %c1_42 = arith.constant 1 : index
    %99 = memref.load %arg2[%c1_42] : memref<3xf32, #tpu.memory_space<smem>>
    memref.store %95, %arg2[%c1_42] : memref<3xf32, #tpu.memory_space<smem>>
    %c2_43 = arith.constant 2 : index
    %100 = memref.load %arg2[%c2_43] : memref<3xf32, #tpu.memory_space<smem>>
    memref.store %97, %arg2[%c2_43] : memref<3xf32, #tpu.memory_space<smem>>
    return
  }
}

</mosaic_0001>

<llo_original>
// kernel: total_loss_6.1
$region0: #{total_loss_6.1}
  #allocation0 [shape = 'u32[]', space=smem, size = 0x4, offset = 0x4, fixed_abs, tag = 'smem constant byte address 0x4 - core index']
  #allocation1 [shape = 'u32[72,128]{1,0:T(1,128)}', space=vmem, size = 0x9000, scoped, tag = 'internal scratch']
  %s0 = inlined_call_operand.vmem [shape: f32[2,2,4], index: 0, kind: input, shape index: {}]
  %s1 = inlined_call_operand.vmem [shape: f32[3,6,8,32], index: 1, kind: input, shape index: {}]
  %s2 = inlined_call_operand.vmem [shape: f32[3], index: 2, kind: output, shape index: {}]
  %s3 = sld [smem:[#allocation0]]
  $region18: #{total_loss_6.1} parent=0
    _
  %s5 = ssub.s32 1, %s3
  %s6 = scalar_select 0, %s5, %s3
  $region1: #{total_loss_6.1} parent=0
    #allocation2 [shape = 'u8[512]{0}', space=smem, size = 0x200, scoped, tag = 'output window, operand 0, single buffered']
    #allocation3 [shape = 's32[1]{0}', space=sflag, size = 0x4, scoped, tag = 'scoped memory for total_loss_6.1']
    %7 = vsyncpa [#allocation3], 0
    // Predicated region
    $region2: #{total_loss_6.1} parent=1 // pred_check
      _
    $region3: #{total_loss_6.1} parent=1 // pred_check_branch
      %9 = sbr.rel (0) target = $region5
    $region4: #{total_loss_6.1} parent=1 // pred_region
      _
    $region5: #{total_loss_6.1} parent=1 // pred_fallthru
      _
    // Predicated region
    $region6: #{total_loss_6.1} parent=1 // pred_check
      _
    $region7: #{total_loss_6.1} parent=1 // pred_check_branch
      %11 = sbr.rel (0) target = $region9
    $region8: #{total_loss_6.1} parent=1 // pred_region
      _
    $region9: #{total_loss_6.1} parent=1 // pred_fallthru
      _
    %v12 = vld [vmem:[%s0] sm:$0x3]
    %s13 = scalar_lea.vmem %s0, 2
    %v14 = vld [vmem:[%s13] sm:$0x3]
    %vm15 = vcmask 25600
    %v16 = vsel %vm15, %v14, 0.0
    %17 = vadd.xlane.f32.xlu0 %v16
    %v18 = vpop.xlane.xlu0 %17
    %v19 = vrcp.pop %v18
    %v20 = vmul.f32 %v18, %v19
    %v21 = vsub.f32 1.0, %v20
    %v22 = vmul.f32 %v19, %v21
    %v23 = vadd.f32 %v19, %v22
    %vm24 = vweird.f32 %v18
    %vm25 = vweird.f32 %v19
    %vm26 = vmor %vm24, %vm25
    %v27 = vsel %vm26, %v19, %v23
    %v28 = vand.u32 2147483647, %v18
    %vm29 = vcmp.eq.f32.partialorder %v28, 8.507059e+37
    %v30 = vand.u32 %v18, 2147483648
    %v31 = vor.u32 1.1754944e-38, %v30
    %v32 = vsel %vm29, %v31, %v27
    %v33 = vmul.f32 %v14, %v32
    %v34 = vlog2.pop %v12
    %v35 = vmul.f32 %v34, 0.6931472
    %v36 = vmax.f32 %v35, -100.0
    %v37 = vsub.f32 1.0, %v12
    %v38 = vlog2.pop %v37
    %v39 = vmul.f32 %v38, 0.6931472
    %v40 = vmax.f32 %v39, -100.0
    %v41 = vmul.f32 %v33, %v36
    %v42 = vsub.f32 1.0, %v33
    %v43 = vmul.f32 %v42, %v40
    %v44 = vadd.f32 %v41, %v43
    %v45 = vsub.f32 0.0, %v44
    %v46 = vsel %vm15, %v45, 0.0
    %47 = vadd.xlane.f32.xlu0 %v46
    %v48 = vpop.xlane.xlu0 %47
    %v49 = vrot.slane %v48, 4
    %v50 = vadd.f32 %v48, %v49
    %v51 = vrot.slane %v50, 2
    %v52 = vadd.f32 %v50, %v51
    %v53 = vrot.slane %v52, 1
    %v54 = vadd.f32 %v52, %v53
    %s55 = vtos %v54
    %s56 = smul.f32 %s55, 0.125
    %v57 = vld [vmem:[%s1] sm:$0xff]
    %v58 = vld [vmem:[%s1 + $0x8] sm:$0xff]
    %v59 = vld [vmem:[%s1 + $0x10] sm:$0xff]
    %v60 = vld [vmem:[%s1 + $0x18] sm:$0xff]
    %v61 = vld [vmem:[%s1 + $0x20] sm:$0xff]
    %v62 = vld [vmem:[%s1 + $0x28] sm:$0xff]
    %s63 = scalar_lea.vmem %s1, 48
    %v64 = vld [vmem:[%s63] sm:$0xff]
    %v65 = vld [vmem:[%s63 + $0x8] sm:$0xff]
    %v66 = vld [vmem:[%s63 + $0x10] sm:$0xff]
    %v67 = vld [vmem:[%s63 + $0x18] sm:$0xff]
    %v68 = vld [vmem:[%s63 + $0x20] sm:$0xff]
    %v69 = vld [vmem:[%s63 + $0x28] sm:$0xff]
    %s70 = scalar_lea.vmem %s1, 96
    %v71 = vld [vmem:[%s70] sm:$0xff]
    %v72 = vld [vmem:[%s70 + $0x8] sm:$0xff]
    %v73 = vld [vmem:[%s70 + $0x10] sm:$0xff]
    %v74 = vld [vmem:[%s70 + $0x18] sm:$0xff]
    %v75 = vld [vmem:[%s70 + $0x20] sm:$0xff]
    %v76 = vld [vmem:[%s70 + $0x28] sm:$0xff]
    %vm77 = vcmask 261120
    %v78 = vsel %vm77, %v57, 0.0
    %v79 = vrot.slane %v78, 4
    %v80 = vadd.f32 %v78, %v79
    %v81 = vrot.slane %v80, 2
    %v82 = vadd.f32 %v80, %v81
    %v83 = vrot.slane %v82, 1
    %v84 = vadd.f32 %v82, %v83
    %v85 = vsel %vm77, %v58, 0.0
    %v86 = vrot.slane %v85, 4
    %v87 = vadd.f32 %v85, %v86
    %v88 = vrot.slane %v87, 2
    %v89 = vadd.f32 %v87, %v88
    %v90 = vrot.slane %v89, 1
    %v91 = vadd.f32 %v89, %v90
    %v92 = vsel %vm77, %v59, 0.0
    %v93 = vrot.slane %v92, 4
    %v94 = vadd.f32 %v92, %v93
    %v95 = vrot.slane %v94, 2
    %v96 = vadd.f32 %v94, %v95
    %v97 = vrot.slane %v96, 1
    %v98 = vadd.f32 %v96, %v97
    %v99 = vsel %vm77, %v60, 0.0
    %v100 = vrot.slane %v99, 4
    %v101 = vadd.f32 %v99, %v100
    %v102 = vrot.slane %v101, 2
    %v103 = vadd.f32 %v101, %v102
    %v104 = vrot.slane %v103, 1
    %v105 = vadd.f32 %v103, %v104
    %v106 = vsel %vm77, %v61, 0.0
    %v107 = vrot.slane %v106, 4
    %v108 = vadd.f32 %v106, %v107
    %v109 = vrot.slane %v108, 2
    %v110 = vadd.f32 %v108, %v109
    %v111 = vrot.slane %v110, 1
    %v112 = vadd.f32 %v110, %v111
    %v113 = vsel %vm77, %v62, 0.0
    %v114 = vrot.slane %v113, 4
    %v115 = vadd.f32 %v113, %v114
    %v116 = vrot.slane %v115, 2
    %v117 = vadd.f32 %v115, %v116
    %v118 = vrot.slane %v117, 1
    %v119 = vadd.f32 %v117, %v118
    %v120 = vrcp.pop 8.0
    %v121 = vmul.f32 8.0, %v120
    %v122 = vsub.f32 1.0, %v121
    %v123 = vmul.f32 %v120, %v122
    %v124 = vadd.f32 %v120, %v123
    %vm125 = vweird.f32 %v120
    %v126 = vsel %vm125, %v120, %v124
    %v127 = vmul.f32 %v84, %v126
    %v128 = vmul.f32 %v91, %v126
    %v129 = vmul.f32 %v98, %v126
    %v130 = vmul.f32 %v105, %v126
    %v131 = vmul.f32 %v112, %v126
    %v132 = vmul.f32 %v119, %v126
    %v133 = vmul.f32 %v127, %v127
    %v134 = vmul.f32 %v128, %v128
    %v135 = vmul.f32 %v129, %v129
    %v136 = vmul.f32 %v130, %v130
    %v137 = vmul.f32 %v131, %v131
    %v138 = vmul.f32 %v132, %v132
    %vm145 = vcmask 1041409
    %v146 = vsel %vm145, %v134, %v133
    %vm147 = vcmask 1042434
    %v148 = vsel %vm147, %v135, %v146
    %vm149 = vcmask 1043459
    %v150 = vsel %vm149, %v136, %v148
    %vm151 = vcmask 1044484
    %v152 = vsel %vm151, %v137, %v150
    %vm153 = vcmask 1045509
    %v154 = vsel %vm153, %v138, %v152
    %vm156 = vcmask 259072
    %v157 = vsel %vm156, %v154, 0.0
    %158 = vadd.xlane.f32.xlu0 %v157
    %v159 = vpop.xlane.xlu0 %158
    %v160 = vmax.f32 %v159, 1e-24
    %v161 = vrsqrt.pop %v160
    %v162 = vmul.f32 %v161, %v160
    %v163 = vmul.f32 %v162, %v161
    %v164 = vmul.f32 0.5, %v163
    %v165 = vsub.f32 1.5, %v164
    %v166 = vmul.f32 %v161, %v165
    %vm167 = vweird.f32 %v160
    %vm168 = vweird.f32 %v161
    %vm169 = vmor %vm167, %vm168
    %v170 = vsel %vm169, %v161, %v166
    %v172 = vrot.slane %v170, 1
    %v173 = vrot.slane %v170, 2
    %v174 = vrot.slane %v170, 3
    %v175 = vrot.slane %v170, 4
    %v176 = vrot.slane %v170, 5
    %v183 = vmul.f32 %v127, %v170
    %v184 = vmul.f32 %v128, %v172
    %v185 = vmul.f32 %v129, %v173
    %v186 = vmul.f32 %v130, %v174
    %v187 = vmul.f32 %v131, %v175
    %v188 = vmul.f32 %v132, %v176
    %v189 = vsel %vm77, %v64, 0.0
    %v190 = vrot.slane %v189, 4
    %v191 = vadd.f32 %v189, %v190
    %v192 = vrot.slane %v191, 2
    %v193 = vadd.f32 %v191, %v192
    %v194 = vrot.slane %v193, 1
    %v195 = vadd.f32 %v193, %v194
    %v196 = vsel %vm77, %v65, 0.0
    %v197 = vrot.slane %v196, 4
    %v198 = vadd.f32 %v196, %v197
    %v199 = vrot.slane %v198, 2
    %v200 = vadd.f32 %v198, %v199
    %v201 = vrot.slane %v200, 1
    %v202 = vadd.f32 %v200, %v201
    %v203 = vsel %vm77, %v66, 0.0
    %v204 = vrot.slane %v203, 4
    %v205 = vadd.f32 %v203, %v204
    %v206 = vrot.slane %v205, 2
    %v207 = vadd.f32 %v205, %v206
    %v208 = vrot.slane %v207, 1
    %v209 = vadd.f32 %v207, %v208
    %v210 = vsel %vm77, %v67, 0.0
    %v211 = vrot.slane %v210, 4
    %v212 = vadd.f32 %v210, %v211
    %v213 = vrot.slane %v212, 2
    %v214 = vadd.f32 %v212, %v213
    %v215 = vrot.slane %v214, 1
    %v216 = vadd.f32 %v214, %v215
    %v217 = vsel %vm77, %v68, 0.0
    %v218 = vrot.slane %v217, 4
    %v219 = vadd.f32 %v217, %v218
    %v220 = vrot.slane %v219, 2
    %v221 = vadd.f32 %v219, %v220
    %v222 = vrot.slane %v221, 1
    %v223 = vadd.f32 %v221, %v222
    %v224 = vsel %vm77, %v69, 0.0
    %v225 = vrot.slane %v224, 4
    %v226 = vadd.f32 %v224, %v225
    %v227 = vrot.slane %v226, 2
    %v228 = vadd.f32 %v226, %v227
    %v229 = vrot.slane %v228, 1
    %v230 = vadd.f32 %v228, %v229
    %v231 = vmul.f32 %v195, %v126
    %v232 = vmul.f32 %v202, %v126
    %v233 = vmul.f32 %v209, %v126
    %v234 = vmul.f32 %v216, %v126
    %v235 = vmul.f32 %v223, %v126
    %v236 = vmul.f32 %v230, %v126
    %v237 = vmul.f32 %v231, %v231
    %v238 = vmul.f32 %v232, %v232
    %v239 = vmul.f32 %v233, %v233
    %v240 = vmul.f32 %v234, %v234
    %v241 = vmul.f32 %v235, %v235
    %v242 = vmul.f32 %v236, %v236
    %v249 = vsel %vm145, %v238, %v237
    %v250 = vsel %vm147, %v239, %v249
    %v251 = vsel %vm149, %v240, %v250
    %v252 = vsel %vm151, %v241, %v251
    %v253 = vsel %vm153, %v242, %v252
    %v255 = vsel %vm156, %v253, 0.0
    %256 = vadd.xlane.f32.xlu0 %v255
    %v257 = vpop.xlane.xlu0 %256
    %v258 = vmax.f32 %v257, 1e-24
    %v259 = vrsqrt.pop %v258
    %v260 = vmul.f32 %v259, %v258
    %v261 = vmul.f32 %v260, %v259
    %v262 = vmul.f32 0.5, %v261
    %v263 = vsub.f32 1.5, %v262
    %v264 = vmul.f32 %v259, %v263
    %vm265 = vweird.f32 %v258
    %vm266 = vweird.f32 %v259
    %vm267 = vmor %vm265, %vm266
    %v268 = vsel %vm267, %v259, %v264
    %v270 = vrot.slane %v268, 1
    %v271 = vrot.slane %v268, 2
    %v272 = vrot.slane %v268, 3
    %v273 = vrot.slane %v268, 4
    %v274 = vrot.slane %v268, 5
    %v281 = vmul.f32 %v231, %v268
    %v282 = vmul.f32 %v232, %v270
    %v283 = vmul.f32 %v233, %v271
    %v284 = vmul.f32 %v234, %v272
    %v285 = vmul.f32 %v235, %v273
    %v286 = vmul.f32 %v236, %v274
    %v287 = vmul.f32 %v71, %v71
    %v288 = vmul.f32 %v72, %v72
    %v289 = vmul.f32 %v73, %v73
    %v290 = vmul.f32 %v74, %v74
    %v291 = vmul.f32 %v75, %v75
    %v292 = vmul.f32 %v76, %v76
    %v293 = vsel %vm77, %v287, 0.0
    %294 = vadd.xlane.f32.xlu0 %v293
    %v295 = vpop.xlane.xlu0 %294
    %v296 = vsel %vm77, %v288, 0.0
    %297 = vadd.xlane.f32.xlu0 %v296
    %v298 = vpop.xlane.xlu0 %297
    %v299 = vsel %vm77, %v289, 0.0
    %300 = vadd.xlane.f32.xlu0 %v299
    %v301 = vpop.xlane.xlu0 %300
    %v302 = vsel %vm77, %v290, 0.0
    %303 = vadd.xlane.f32.xlu0 %v302
    %v304 = vpop.xlane.xlu0 %303
    %v305 = vsel %vm77, %v291, 0.0
    %306 = vadd.xlane.f32.xlu0 %v305
    %v307 = vpop.xlane.xlu0 %306
    %v308 = vsel %vm77, %v292, 0.0
    %309 = vadd.xlane.f32.xlu0 %v308
    %v310 = vpop.xlane.xlu0 %309
    %v311 = vmax.f32 %v295, 1e-24
    %v312 = vmax.f32 %v298, 1e-24
    %v313 = vmax.f32 %v301, 1e-24
    %v314 = vmax.f32 %v304, 1e-24
    %v315 = vmax.f32 %v307, 1e-24
    %v316 = vmax.f32 %v310, 1e-24
    %v317 = vrsqrt.pop %v311
    %v318 = vmul.f32 %v317, %v311
    %v319 = vmul.f32 %v318, %v317
    %v320 = vmul.f32 0.5, %v319
    %v321 = vsub.f32 1.5, %v320
    %v322 = vmul.f32 %v317, %v321
    %vm323 = vweird.f32 %v311
    %vm324 = vweird.f32 %v317
    %vm325 = vmor %vm323, %vm324
    %v326 = vsel %vm325, %v317, %v322
    %v327 = vrsqrt.pop %v312
    %v328 = vmul.f32 %v327, %v312
    %v329 = vmul.f32 %v328, %v327
    %v330 = vmul.f32 0.5, %v329
    %v331 = vsub.f32 1.5, %v330
    %v332 = vmul.f32 %v327, %v331
    %vm333 = vweird.f32 %v312
    %vm334 = vweird.f32 %v327
    %vm335 = vmor %vm333, %vm334
    %v336 = vsel %vm335, %v327, %v332
    %v337 = vrsqrt.pop %v313
    %v338 = vmul.f32 %v337, %v313
    %v339 = vmul.f32 %v338, %v337
    %v340 = vmul.f32 0.5, %v339
    %v341 = vsub.f32 1.5, %v340
    %v342 = vmul.f32 %v337, %v341
    %vm343 = vweird.f32 %v313
    %vm344 = vweird.f32 %v337
    %vm345 = vmor %vm343, %vm344
    %v346 = vsel %vm345, %v337, %v342
    %v347 = vrsqrt.pop %v314
    %v348 = vmul.f32 %v347, %v314
    %v349 = vmul.f32 %v348, %v347
    %v350 = vmul.f32 0.5, %v349
    %v351 = vsub.f32 1.5, %v350
    %v352 = vmul.f32 %v347, %v351
    %vm353 = vweird.f32 %v314
    %vm354 = vweird.f32 %v347
    %vm355 = vmor %vm353, %vm354
    %v356 = vsel %vm355, %v347, %v352
    %v357 = vrsqrt.pop %v315
    %v358 = vmul.f32 %v357, %v315
    %v359 = vmul.f32 %v358, %v357
    %v360 = vmul.f32 0.5, %v359
    %v361 = vsub.f32 1.5, %v360
    %v362 = vmul.f32 %v357, %v361
    %vm363 = vweird.f32 %v315
    %vm364 = vweird.f32 %v357
    %vm365 = vmor %vm363, %vm364
    %v366 = vsel %vm365, %v357, %v362
    %v367 = vrsqrt.pop %v316
    %v368 = vmul.f32 %v367, %v316
    %v369 = vmul.f32 %v368, %v367
    %v370 = vmul.f32 0.5, %v369
    %v371 = vsub.f32 1.5, %v370
    %v372 = vmul.f32 %v367, %v371
    %vm373 = vweird.f32 %v316
    %vm374 = vweird.f32 %v367
    %vm375 = vmor %vm373, %vm374
    %v376 = vsel %vm375, %v367, %v372
    %v377 = vmul.f32 %v71, %v326
    %v378 = vmul.f32 %v72, %v336
    %v379 = vmul.f32 %v73, %v346
    %v380 = vmul.f32 %v74, %v356
    %v381 = vmul.f32 %v75, %v366
    %v382 = vmul.f32 %v76, %v376
    %v389 = vrot.slane %v377, 7
    %v390 = vrot.slane %v378, 7
    %v391 = vrot.slane %v379, 7
    %v392 = vrot.slane %v380, 7
    %v393 = vrot.slane %v381, 7
    %v394 = vrot.slane %v382, 7
    %vm401 = vcmask 1040384
    %v402 = vsel %vm401, %v281, %v389
    %v403 = vsel %vm401, %v282, %v390
    %v404 = vsel %vm401, %v283, %v391
    %v405 = vsel %vm401, %v284, %v392
    %v406 = vsel %vm401, %v285, %v393
    %v407 = vsel %vm401, %v286, %v394
    %v408 = vperm.slane %v183, 0
    %v409 = vperm.slane %v184, 0
    %v410 = vperm.slane %v185, 0
    %v411 = vperm.slane %v186, 0
    %v412 = vperm.slane %v187, 0
    %v413 = vperm.slane %v188, 0
    %v414 = vmul.f32 %v408, %v402
    %v415 = vmul.f32 %v408, %v389
    %v416 = vmul.f32 %v409, %v403
    %v417 = vmul.f32 %v409, %v390
    %v418 = vmul.f32 %v410, %v404
    %v419 = vmul.f32 %v410, %v391
    %v420 = vmul.f32 %v411, %v405
    %v421 = vmul.f32 %v411, %v392
    %v422 = vmul.f32 %v412, %v406
    %v423 = vmul.f32 %v412, %v393
    %v424 = vmul.f32 %v413, %v407
    %v425 = vmul.f32 %v413, %v394
    %v426 = vsel %vm77, %v414, 0.0
    %427 = vadd.xlane.f32.xlu0 %v426
    %v428 = vpop.xlane.xlu0 %427
    %vm429 = vcmask 253952
    %v430 = vsel %vm429, %v415, 0.0
    %431 = vadd.xlane.f32.xlu0 %v430
    %v432 = vpop.xlane.xlu0 %431
    %v433 = vsel %vm77, %v416, 0.0
    %434 = vadd.xlane.f32.xlu0 %v433
    %v435 = vpop.xlane.xlu0 %434
    %v436 = vsel %vm429, %v417, 0.0
    %437 = vadd.xlane.f32.xlu0 %v436
    %v438 = vpop.xlane.xlu0 %437
    %v439 = vsel %vm77, %v418, 0.0
    %440 = vadd.xlane.f32.xlu0 %v439
    %v441 = vpop.xlane.xlu0 %440
    %v442 = vsel %vm429, %v419, 0.0
    %443 = vadd.xlane.f32.xlu0 %v442
    %v444 = vpop.xlane.xlu0 %443
    %v445 = vsel %vm77, %v420, 0.0
    %446 = vadd.xlane.f32.xlu0 %v445
    %v447 = vpop.xlane.xlu0 %446
    %v448 = vsel %vm429, %v421, 0.0
    %449 = vadd.xlane.f32.xlu0 %v448
    %v450 = vpop.xlane.xlu0 %449
    %v451 = vsel %vm77, %v422, 0.0
    %452 = vadd.xlane.f32.xlu0 %v451
    %v453 = vpop.xlane.xlu0 %452
    %v454 = vsel %vm429, %v423, 0.0
    %455 = vadd.xlane.f32.xlu0 %v454
    %v456 = vpop.xlane.xlu0 %455
    %v457 = vsel %vm77, %v424, 0.0
    %458 = vadd.xlane.f32.xlu0 %v457
    %v459 = vpop.xlane.xlu0 %458
    %v460 = vsel %vm429, %v425, 0.0
    %461 = vadd.xlane.f32.xlu0 %v460
    %v462 = vpop.xlane.xlu0 %461
    %v463 = vmul.f32 %v428, 14.285714
    %v464 = vmul.f32 %v432, 14.285714
    %v465 = vmul.f32 %v435, 14.285714
    %v466 = vmul.f32 %v438, 14.285714
    %v467 = vmul.f32 %v441, 14.285714
    %v468 = vmul.f32 %v444, 14.285714
    %v469 = vmul.f32 %v447, 14.285714
    %v470 = vmul.f32 %v450, 14.285714
    %v471 = vmul.f32 %v453, 14.285714
    %v472 = vmul.f32 %v456, 14.285714
    %v473 = vmul.f32 %v459, 14.285714
    %v474 = vmul.f32 %v462, 14.285714
    %v487 = vlaneseq
    %v488 = vand.u32 %v487, 127
    %v489 = vperm.slane %v463, %v488
    %v490 = vadd.s32 %v488, 4294967288
    %v491 = vperm.slane %v464, %v490
    %vm492 = vcmask 130112
    %v493 = vsel %vm492, %v491, %v489
    %v494 = vperm.slane %v465, %v488
    %v495 = vperm.slane %v466, %v490
    %v496 = vsel %vm492, %v495, %v494
    %v497 = vperm.slane %v467, %v488
    %v498 = vperm.slane %v468, %v490
    %v499 = vsel %vm492, %v498, %v497
    %v500 = vperm.slane %v469, %v488
    %v501 = vperm.slane %v470, %v490
    %v502 = vsel %vm492, %v501, %v500
    %v503 = vperm.slane %v471, %v488
    %v504 = vperm.slane %v472, %v490
    %v505 = vsel %vm492, %v504, %v503
    %v506 = vperm.slane %v473, %v488
    %v507 = vperm.slane %v474, %v490
    %v508 = vsel %vm492, %v507, %v506
    %v509 = vsel %vm145, %v496, %v493
    %v510 = vsel %vm147, %v499, %v509
    %v511 = vsel %vm149, %v502, %v510
    %v512 = vsel %vm151, %v505, %v511
    %v513 = vsel %vm153, %v508, %v512
    %vm515 = vcmask 70656
    %v516 = vsel %vm515, %v513, -inf
    %517 = vmax.xlane.f32.xlu0 %v516
    %v518 = vpop.xlane.xlu0 %517
    %v520 = vperm.slane %v518, 0
    %v521 = vperm.slane %v518, 1
    %v522 = vperm.slane %v518, 2
    %v523 = vperm.slane %v518, 3
    %v524 = vperm.slane %v518, 4
    %v525 = vperm.slane %v518, 5
    %v532 = vsub.f32 %v463, %v520
    %v533 = vsub.f32 %v464, %v520
    %v534 = vsub.f32 %v465, %v521
    %v535 = vsub.f32 %v466, %v521
    %v536 = vsub.f32 %v467, %v522
    %v537 = vsub.f32 %v468, %v522
    %v538 = vsub.f32 %v469, %v523
    %v539 = vsub.f32 %v470, %v523
    %v540 = vsub.f32 %v471, %v524
    %v541 = vsub.f32 %v472, %v524
    %v542 = vsub.f32 %v473, %v525
    %v543 = vsub.f32 %v474, %v525
    %v544 = vmul.f32 %v532, 1.442695
    %v545 = vpow.pop %v544
    %v546 = vmul.f32 %v533, 1.442695
    %v547 = vpow.pop %v546
    %v548 = vmul.f32 %v534, 1.442695
    %v549 = vpow.pop %v548
    %v550 = vmul.f32 %v535, 1.442695
    %v551 = vpow.pop %v550
    %v552 = vmul.f32 %v536, 1.442695
    %v553 = vpow.pop %v552
    %v554 = vmul.f32 %v537, 1.442695
    %v555 = vpow.pop %v554
    %v556 = vmul.f32 %v538, 1.442695
    %v557 = vpow.pop %v556
    %v558 = vmul.f32 %v539, 1.442695
    %v559 = vpow.pop %v558
    %v560 = vmul.f32 %v540, 1.442695
    %v561 = vpow.pop %v560
    %v562 = vmul.f32 %v541, 1.442695
    %v563 = vpow.pop %v562
    %v564 = vmul.f32 %v542, 1.442695
    %v565 = vpow.pop %v564
    %v566 = vmul.f32 %v543, 1.442695
    %v567 = vpow.pop %v566
    %580 = vset.pattern.permute.xlu0 0
    %581 = vperm.xlu0 %580, %v545
    %v582 = vpop.permute.xlu0 %581
    %583 = vset.pattern.permute.xlu0 0
    %584 = vperm.xlu0 %583, %v547
    %v585 = vpop.permute.xlu0 %584
    %586 = vset.pattern.permute.xlu0 0
    %587 = vperm.xlu0 %586, %v549
    %v588 = vpop.permute.xlu0 %587
    %589 = vset.pattern.permute.xlu0 0
    %590 = vperm.xlu0 %589, %v551
    %v591 = vpop.permute.xlu0 %590
    %592 = vset.pattern.permute.xlu0 0
    %593 = vperm.xlu0 %592, %v553
    %v594 = vpop.permute.xlu0 %593
    %595 = vset.pattern.permute.xlu0 0
    %596 = vperm.xlu0 %595, %v555
    %v597 = vpop.permute.xlu0 %596
    %598 = vset.pattern.permute.xlu0 0
    %599 = vperm.xlu0 %598, %v557
    %v600 = vpop.permute.xlu0 %599
    %601 = vset.pattern.permute.xlu0 0
    %602 = vperm.xlu0 %601, %v559
    %v603 = vpop.permute.xlu0 %602
    %604 = vset.pattern.permute.xlu0 0
    %605 = vperm.xlu0 %604, %v561
    %v606 = vpop.permute.xlu0 %605
    %607 = vset.pattern.permute.xlu0 0
    %608 = vperm.xlu0 %607, %v563
    %v609 = vpop.permute.xlu0 %608
    %610 = vset.pattern.permute.xlu0 0
    %611 = vperm.xlu0 %610, %v565
    %v612 = vpop.permute.xlu0 %611
    %613 = vset.pattern.permute.xlu0 0
    %614 = vperm.xlu0 %613, %v567
    %v615 = vpop.permute.xlu0 %614
    %v616 = vperm.slane %v582, %v488
    %v617 = vperm.slane %v585, %v490
    %v618 = vsel %vm492, %v617, %v616
    %v619 = vperm.slane %v588, %v488
    %v620 = vperm.slane %v591, %v490
    %v621 = vsel %vm492, %v620, %v619
    %v622 = vperm.slane %v594, %v488
    %v623 = vperm.slane %v597, %v490
    %v624 = vsel %vm492, %v623, %v622
    %v625 = vperm.slane %v600, %v488
    %v626 = vperm.slane %v603, %v490
    %v627 = vsel %vm492, %v626, %v625
    %v628 = vperm.slane %v606, %v488
    %v629 = vperm.slane %v609, %v490
    %v630 = vsel %vm492, %v629, %v628
    %v631 = vperm.slane %v612, %v488
    %v632 = vperm.slane %v615, %v490
    %v633 = vsel %vm492, %v632, %v631
    %v634 = vsel %vm145, %v621, %v618
    %v635 = vsel %vm147, %v624, %v634
    %v636 = vsel %vm149, %v627, %v635
    %v637 = vsel %vm151, %v630, %v636
    %v638 = vsel %vm153, %v633, %v637
    %v640 = vsel %vm515, %v638, 0.0
    %641 = vadd.xlane.f32.xlu0 %v640
    %v642 = vpop.xlane.xlu0 %641
    %v643 = vlog2.pop %v642
    %v644 = vmul.f32 %v643, 0.6931472
    %v645 = vadd.f32 %v644, %v518
    %v646 = vrot.slane %v465, 7
    %v647 = vsel %vm145, %v646, %v463
    %v648 = vrot.slane %v467, 6
    %v649 = vsel %vm147, %v648, %v647
    %v650 = vrot.slane %v469, 5
    %v651 = vsel %vm149, %v650, %v649
    %v652 = vrot.slane %v471, 4
    %v653 = vsel %vm151, %v652, %v651
    %v654 = vrot.slane %v473, 3
    %v655 = vsel %vm153, %v654, %v653
    %v657 = vsub.f32 %v645, %v655
    %v658 = vlaneseq
    %v659 = vshrl.u32 %v658, 7
    %vm660 = vcmp.ge.s32.totalorder %v659, 4
    %v661 = vsel %vm660, 0.5, 1.0
    %v662 = vmul.f32 %v657, %v661
    %vm663 = vcmask 5120
    %v664 = vsel %vm663, %v662, 0.0
    %665 = vadd.xlane.f32.xlu0 %v664
    %v666 = vpop.xlane.xlu0 %665
    %v667 = vrot.slane %v666, 4
    %v668 = vadd.f32 %v666, %v667
    %v669 = vrot.slane %v668, 2
    %v670 = vadd.f32 %v668, %v669
    %v671 = vrot.slane %v670, 1
    %v672 = vadd.f32 %v670, %v671
    %s673 = vtos %v672
    %s674 = smul.f32 %s673, 0.5
    %s675 = smul.f32 %s674, 0.01
    %s676 = sadd.f32 %s56, %s675
    %s677 = scalar_lea.smem [#allocation2], 0
    %678 = sst [smem:[%s677]] %s56
    %s679 = scalar_lea.smem [#allocation2], 1
    %680 = sst [smem:[%s679]] %s674
    %s681 = scalar_lea.smem [#allocation2], 2
    %682 = sst [smem:[%s681]] %s676
    // Predicated region
    $region10: #{total_loss_6.1} parent=1 // pred_check
      _
    $region11: #{total_loss_6.1} parent=1 // pred_check_branch
      %684 = sbr.rel (0) target = $region13
    $region12: #{total_loss_6.1} parent=1 // pred_region
      %686 = vsyncadd [#allocation3], 0
      %s688 = sshll.u32 %s2, 4
      %s689 = int_to_ptr.vmem [resolvable:$true] %s688
      %691 = dma.smem_to_vmem [#allocation2], 16, %s689, [#allocation3]
    $region13: #{total_loss_6.1} parent=1 // pred_fallthru
      _
    // Predicated region
    $region14: #{total_loss_6.1} parent=1 // pred_check
      _
    $region15: #{total_loss_6.1} parent=1 // pred_check_branch
      %693 = sbr.rel (0) target = $region17
    $region16: #{total_loss_6.1} parent=1 // pred_region
      %695 = dma.done [#allocation3], 16
    $region17: #{total_loss_6.1} parent=1 // pred_fallthru
      _
    %696 = sfence
    %697 = vsyncpa [#allocation3], 1

</llo_original>
